<compile_context>
chip_gen: v5e
topology: v5e:2x2
jax: 0.10.0
libtpu: 0.0.40
codegen_flags: <defaults>
</compile_context>

<pallas_src>
import jax
import jax.numpy as jnp
from jax.experimental import pallas as pl
from jax.experimental.pallas import tpu as pltpu


def _broadcast_rows_kernel(table_ref, out_ref):
    # table_ref: (1, N*D)   resident table row (same block every grid step)
    # out_ref:   (TBT, N*D) lane-dense output row tile for this grid step
    out_ref[...] = jnp.broadcast_to(table_ref[...], out_ref.shape)


def _choose_row_tile(bt_rows, row_bytes, *, target_tile_bytes=4 << 20,
                     min_grid_steps=2):
    """Pick a row-tile size TBT for the (B*T, N*D) output.

    Constraints: TBT divides B*T and is a multiple of 8 (sublane tiling), or
    TBT == B*T (block equals full dim, always legal). Prefer the largest tile
    whose single buffer stays under `target_tile_bytes`, but keep at least
    `min_grid_steps` grid steps so v7x can shard across both TensorCores.
    """
    if bt_rows <= 8:
        return bt_rows
    divisors = [t for t in range(8, bt_rows + 1, 8) if bt_rows % t == 0]
    if not divisors:
        # No multiple-of-8 divisor: fall back to one full-extent block.
        return bt_rows
    fitting = [t for t in divisors if t * row_bytes <= target_tile_bytes]
    tile = max(fitting) if fitting else min(divisors)
    if bt_rows // tile < min_grid_steps:
        smaller = [t for t in divisors if bt_rows // t >= min_grid_steps]
        if smaller:
            tile = max(smaller)
    return tile


def position_embedding_forward(x, table, *, target_tile_bytes=4 << 20):
    """Pallas implementation of PositionEmbedding.forward.

    x:     (B, T, N, F) -- only its shape is used (matches PyTorch semantics).
    table: (N, D) position-embedding table (learnable weights or sinusoidal).
    returns (B, T, N, D): `table` broadcast over (B, T).
    """
    B, T, N, F = x.shape
    Nt, D = table.shape
    assert Nt == N, "embedding table num_nodes must match x's num_nodes axis"

    BT = B * T
    ND = N * D
    row_bytes = ND * jnp.dtype(table.dtype).itemsize

    # Lane-dense flat view of the table: one (1, N*D) row held in VMEM.
    table_row = table.reshape(1, ND)

    tbt = _choose_row_tile(BT, row_bytes, target_tile_bytes=target_tile_bytes)
    grid = (BT // tbt,)

    out_flat = pl.pallas_call(
        _broadcast_rows_kernel,
        out_shape=jax.ShapeDtypeStruct((BT, ND), table.dtype),
        grid_spec=pltpu.PrefetchScalarGridSpec(
            num_scalar_prefetch=0,
            grid=grid,
            in_specs=[
                # Constant index_map => the tiny table row is DMA'd once and
                # stays resident; no re-fetch across grid steps.
                pl.BlockSpec((1, ND), lambda i: (0, 0)),
            ],
            # Large lane-dense output tiles: last dim is the full N*D extent.
            out_specs=pl.BlockSpec((tbt, ND), lambda i: (i, 0)),
        ),
        compiler_params=pltpu.CompilerParams(
            dimension_semantics=("parallel",),
        ),
    )(table_row)

    return out_flat.reshape(B, T, N, D)


def make_learnable_table(key, num_nodes, position_dim, dtype=jnp.float32):
    # nn.Embedding default init: N(0, 1)
    return jax.random.normal(key, (num_nodes, position_dim), dtype=dtype)


def make_sinusoidal_table(num_nodes, position_dim, dtype=jnp.float32):
    # Matches the PyTorch double loop (assumes even position_dim, like the
    # original): enc[pos, i] = sin(pos / 10000**(i/D)), enc[pos, i+1] = cos(...)
    pos = jnp.arange(num_nodes, dtype=jnp.float32)[:, None]            # (N, 1)
    i_even = jnp.arange(0, position_dim, 2, dtype=jnp.float32)[None]   # (1, D/2)
    denom = jnp.power(10000.0, i_even / position_dim)                  # (1, D/2)
    angles = pos / denom                                               # (N, D/2)
    enc = jnp.zeros((num_nodes, position_dim), dtype=jnp.float32)
    enc = enc.at[:, 0::2].set(jnp.sin(angles))
    enc = enc.at[:, 1::2].set(jnp.cos(angles))
    return enc.astype(dtype)


if __name__ == "__main__":
    key = jax.random.PRNGKey(0)
    k_x, k_emb = jax.random.split(key)

    # Small shapes consistent with the module's forward signature.
    batch_size, in_steps, num_nodes, feat_dim = 2, 8, 16, 4
    position_dim = 32

    x = jax.random.normal(
        k_x, (batch_size, in_steps, num_nodes, feat_dim), dtype=jnp.float32)

    # --- learnable method ---
    table_learn = make_learnable_table(k_emb, num_nodes, position_dim)
    out_learn = position_embedding_forward(x, table_learn)
    out_learn = jax.block_until_ready(out_learn)
    ref_learn = jnp.broadcast_to(
        table_learn[None, None],
        (batch_size, in_steps, num_nodes, position_dim))
    assert out_learn.shape == (batch_size, in_steps, num_nodes, position_dim)
    assert jnp.allclose(out_learn, ref_learn)

    # --- sinusoidal method ---
    table_sin = make_sinusoidal_table(num_nodes, position_dim)
    out_sin = position_embedding_forward(x, table_sin)
    out_sin = jax.block_until_ready(out_sin)
    ref_sin = jnp.broadcast_to(
        table_sin[None, None],
        (batch_size, in_steps, num_nodes, position_dim))
    assert out_sin.shape == (batch_size, in_steps, num_nodes, position_dim)
    assert jnp.allclose(out_sin, ref_sin)

    print("KERNEL_OK")
</pallas_src>

<mosaic_0001>
module attributes {stable_mosaic.version = 11 : i64} {
  func.func @_broadcast_rows_kernel(%arg0: i32, %arg1: memref<1x512xf32, #tpu.memory_space<vmem>>, %arg2: memref<8x512xf32, #tpu.memory_space<vmem>>) attributes {dimension_semantics = [#tpu.dimension_semantics<parallel>], iteration_bounds = array<i64: 2>, scalar_prefetch = 0 : i64, scratch_operands = 0 : i64, tpu.core_type = #tpu.core_type<tc>, window_params = [{pipeline_mode = #tpu.pipeline_mode<synchronous>, transform_indices = @transform_0, window_bounds = array<i64: 1, 512>}, {transform_indices = @transform_1, window_bounds = array<i64: 8, 512>}]} {
    %c0 = arith.constant 0 : index
    %c0_0 = arith.constant 0 : index
    %0 = vector.load %arg1[%c0, %c0_0] : memref<1x512xf32, #tpu.memory_space<vmem>>, vector<1x512xf32>
    %1 = vector.shape_cast %0 : vector<1x512xf32> to vector<1x512xf32>
    %2 = vector.broadcast %1 : vector<1x512xf32> to vector<8x512xf32>
    %c0_1 = arith.constant 0 : index
    %c0_2 = arith.constant 0 : index
    %3 = vector.load %arg2[%c0_1, %c0_2] : memref<8x512xf32, #tpu.memory_space<vmem>>, vector<8x512xf32>
    tpu.vector_store %arg2[%c0_1, %c0_2], %2 {strides = array<i32>} : memref<8x512xf32, #tpu.memory_space<vmem>>, vector<8x512xf32>,
    return
  }
  func.func @transform_0(%arg0: i32) -> (i32, i32) {
    %c0_i32 = arith.constant 0 : i32
    %c0_i32_0 = arith.constant 0 : i32
    %c0_i32_1 = arith.constant 0 : i32
    return %c0_i32, %c0_i32_0 : i32, i32
  }
  func.func @transform_1(%arg0: i32) -> (i32, i32) {
    %c0_i32 = arith.constant 0 : i32
    %c0_i32_0 = arith.constant 0 : i32
    return %arg0, %c0_i32 : i32, i32
  }
}

</mosaic_0001>

<llo_original>
// kernel: tpu_custom_call.1
$region0: #{tpu_custom_call.1}
  #allocation0 [shape = 'u32[]', space=smem, size = 0x4, offset = 0x4, fixed_abs, tag = 'smem constant byte address 0x4 - core index']
  #allocation1 [shape = 'u32[72,128]{1,0:T(1,128)}', space=vmem, size = 0x9000, scoped, tag = 'internal scratch']
  %s0 = inlined_call_operand.hbm [shape: f32[1,512], index: 0, kind: input, shape index: {}]
  %s1 = inlined_call_operand.hbm [shape: f32[16,512], index: 1, kind: output, shape index: {}]
  %s2 = sld [smem:[#allocation0]]
  $region41: #{tpu_custom_call.1} parent=0
    _
  %s4 = ssub.s32 1, %s2
  %s5 = scalar_select 0, %s4, %s2
  $region1: #{tpu_custom_call.1} parent=0
    #allocation2 [shape = 'u8[2048]{0}', space=vmem, size = 0x800, scoped, tag = 'input window, operand 0, single buffered']
    #allocation3 [shape = 's32[2]{0}', space=sflag, size = 0x8, scoped, tag = 'scoped memory for tpu_custom_call.1']
    #allocation4 [shape = 's32[2]{0}', space=sflag, size = 0x8, scoped, tag = 'scoped memory for tpu_custom_call.1']
    #allocation5 [shape = 'u8[32768]{0}', space=vmem, size = 0x8000, scoped, tag = 'output window, operand 0']
    %6 = vsyncpa [#allocation3], 0
    %7 = vsyncpa [#allocation4], 0
    %s8 = scalar_lea.sflag [#allocation4], 1
    %9 = vsyncpa %s8, 0
    loop: start=0, step=1, limit=4
    $region2: #{tpu_custom_call.1} parent=1 // loop_pre_header
      _
    $region3: #{tpu_custom_call.1} parent=1 // loop_header
      %s11 = sphi 0, %s15
      %p12 = scmp.ge.s32.totalorder %s11, 4
      %s19 = sphi 0, %s19
      %s21 = sphi 0, %s19
      %s22 = sphi 0, %s21
      %s36 = sphi 0, %s22
      %s42 = sphi 0, %s44
      %s45 = sphi 0, %s42
      %s46 = sphi 0, %s45
      %s62 = sphi 0, %s46
    $region4: #{tpu_custom_call.1} parent=1 // loop_header_branch
      %14 = sbr.rel (%p12) target = $region8
    $region5: #{tpu_custom_call.1} parent=1 // loop_body
      %s16 = ssub.s32 %s11, 1
      %s17 = ssub.s32 %s11, 2
      %s18 = sadd.s32 %s11, 1
      %s20 = sadd.s32 %s19, 1
      %p23 = scmp.eq.s32.totalorder %s11, 1
      %p24 = scmp.ne.s32.totalorder %s19, %s21
      %p25 = scmp.eq.s32.totalorder %s11, 0
      %p26 = por %p24, %p25
      %p27 = scmp.ne.s32.totalorder %s19, %s21
      %p28 = scmp.eq.s32.totalorder %s16, 1
      %p29 = por %p27, %p28
      %p30 = scmp.ne.s32.totalorder %s21, %s22
      %p31 = scmp.eq.s32.totalorder %s16, 0
      %p32 = por %p30, %p31
      %p33 = scmp.ne.s32.totalorder %s21, %s22
      %p34 = scmp.eq.s32.totalorder %s17, 1
      %p35 = por %p33, %p34
      %p37 = scmp.ne.s32.totalorder %s22, %s36
      %p38 = scmp.eq.s32.totalorder %s17, 0
      %p39 = por %p37, %p38
      %s40 = ssub.s32 %s11, %s18
      %p41 = scmp.eq.s32.totalorder %s40, 0
      %s43 = sadd.s32 %s42, 1
      %s44 = scalar_select %p41, %s42, %s43
      %p47 = pneg %p41
      %p48 = scmp.eq.s32.totalorder %s11, 1
      %p49 = por %p47, %p48
      %p50 = scmp.ne.s32.totalorder %s42, %s45
      %p51 = scmp.eq.s32.totalorder %s11, 0
      %p52 = por %p50, %p51
      %p53 = scmp.ne.s32.totalorder %s42, %s45
      %p54 = scmp.eq.s32.totalorder %s16, 1
      %p55 = por %p53, %p54
      %p56 = scmp.ne.s32.totalorder %s45, %s46
      %p57 = scmp.eq.s32.totalorder %s16, 0
      %p58 = por %p56, %p57
      %p59 = scmp.ne.s32.totalorder %s45, %s46
      %p60 = scmp.eq.s32.totalorder %s17, 1
      %p61 = por %p59, %p60
      %p63 = scmp.ne.s32.totalorder %s46, %s62
      %p64 = scmp.eq.s32.totalorder %s17, 0
      %p65 = por %p63, %p64
      %p66 = scmp.le.s32.totalorder 1, %s11
      %p67 = scmp.lt.s32.totalorder %s11, 3
      %p68 = pnand %p66, %p67
      %p69 = pneg %p68
      // Predicated region
      $region9: #{tpu_custom_call.1} parent=5 // pred_check
        _
      $region10: #{tpu_custom_call.1} parent=5 // pred_check_branch
        %71 = sbr.rel (%p68) target = $region12
      $region11: #{tpu_custom_call.1} parent=5 // pred_region
        %s72 = ssub.s32 %s11, 1
        // Predicated region
        $region13: #{tpu_custom_call.1} parent=11 // pred_check
          %p73 = pneg %p32
        $region14: #{tpu_custom_call.1} parent=11 // pred_check_branch
          %75 = sbr.rel (%p73) target = $region16
        $region15: #{tpu_custom_call.1} parent=11 // pred_region
          %77 = vsyncadd [#allocation3], 0
          %s79 = sshll.u32 %s0, 4
          %s80 = int_to_ptr.hbm [resolvable:$true] %s79
          %s81 = sshll.u32 [#allocation2], 4
          %s82 = int_to_ptr.vmem [resolvable:$true] %s81
          %84 = dma.hbm_to_vmem [thread:$0]  %s80, 64, %s82, [#allocation3]
        $region16: #{tpu_custom_call.1} parent=11 // pred_fallthru
          _
      $region12: #{tpu_custom_call.1} parent=5 // pred_fallthru
        _
      %p85 = scmp.lt.s32.totalorder %s11, 2
      // Predicated region
      $region17: #{tpu_custom_call.1} parent=5 // pred_check
        %p86 = pneg %p85
      $region18: #{tpu_custom_call.1} parent=5 // pred_check_branch
        %88 = sbr.rel (%p86) target = $region20
      $region19: #{tpu_custom_call.1} parent=5 // pred_region
        _
      $region20: #{tpu_custom_call.1} parent=5 // pred_fallthru
        _
      %p89 = scmp.le.s32.totalorder 1, %s11
      %p90 = scmp.lt.s32.totalorder %s11, 3
      %p91 = pnand %p89, %p90
      %p92 = pneg %p91
      // Predicated region
      $region21: #{tpu_custom_call.1} parent=5 // pred_check
        _
      $region22: #{tpu_custom_call.1} parent=5 // pred_check_branch
        %94 = sbr.rel (%p91) target = $region24
      $region23: #{tpu_custom_call.1} parent=5 // pred_region
        %s95 = ssub.s32 %s11, 1
        // Predicated region
        $region25: #{tpu_custom_call.1} parent=23 // pred_check
          %p96 = pneg %p32
        $region26: #{tpu_custom_call.1} parent=23 // pred_check_branch
          %98 = sbr.rel (%p96) target = $region28
        $region27: #{tpu_custom_call.1} parent=23 // pred_region
          %100 = dma.done [#allocation3], 64
        $region28: #{tpu_custom_call.1} parent=23 // pred_fallthru
          _
        %p101 = pneg %p32
        %p102 = pneg %p29
        %p103 = pneg %p58
        %p104 = pneg %p55
        %s105 = sand.u32 %s45, 1
        %s106 = scalar_lea.sflag [#allocation4], %s105
        %s107 = sand.u32 %s45, 1
        %s108 = smul.addr %s107, 32
        %s109 = scalar_lea.vmem [#allocation5], %s108
        %v110 = vld [vmem:[#allocation2] sm:$0xf]
        %v112 = vperm.slane %v110, 0
        %v113 = vperm.slane %v110, 1
        %v114 = vperm.slane %v110, 2
        %v115 = vperm.slane %v110, 3
        %120 = vst [vmem:[%s109] sm:$0xff] %v112
        %121 = vst [vmem:[%s109 + $0x8] sm:$0xff] %v113
        %122 = vst [vmem:[%s109 + $0x10] sm:$0xff] %v114
        %123 = vst [vmem:[%s109 + $0x18] sm:$0xff] %v115
        %s124 = sand.u32 %s45, 1
        %s125 = scalar_lea.sflag [#allocation4], %s124
        %s126 = sand.u32 %s45, 1
        %s127 = smul.addr %s126, 32
        %s128 = scalar_lea.vmem [#allocation5], %s127
        // Predicated region
        $region29: #{tpu_custom_call.1} parent=23 // pred_check
          %p129 = pneg %p55
        $region30: #{tpu_custom_call.1} parent=23 // pred_check_branch
          %131 = sbr.rel (%p129) target = $region32
        $region31: #{tpu_custom_call.1} parent=23 // pred_region
          %133 = vsyncadd %s125, 0
          %s134 = smul.addr %s16, 4
          %s135 = smul.addr %s134, 8
          %s136 = scalar_lea.hbm %s1, %s135
          %s138 = sshll.u32 %s128, 4
          %s139 = int_to_ptr.vmem [resolvable:$true] %s138
          %s140 = sshll.u32 %s136, 4
          %s141 = int_to_ptr.hbm [resolvable:$true] %s140
          %143 = dma.vmem_to_hbm [thread:$0]  %s139, 512, %s141, %s125
        $region32: #{tpu_custom_call.1} parent=23 // pred_fallthru
          _
      $region24: #{tpu_custom_call.1} parent=5 // pred_fallthru
        _
      %p144 = scmp.le.s32.totalorder 2, %s11
      // Predicated region
      $region33: #{tpu_custom_call.1} parent=5 // pred_check
        %p145 = pneg %p144
      $region34: #{tpu_custom_call.1} parent=5 // pred_check_branch
        %147 = sbr.rel (%p145) target = $region36
      $region35: #{tpu_custom_call.1} parent=5 // pred_region
        %s148 = ssub.s32 %s11, 2
        // Predicated region
        $region37: #{tpu_custom_call.1} parent=35 // pred_check
          %p149 = pneg %p61
        $region38: #{tpu_custom_call.1} parent=35 // pred_check_branch
          %151 = sbr.rel (%p149) target = $region40
        $region39: #{tpu_custom_call.1} parent=35 // pred_region
          %s152 = sand.u32 %s46, 1
          %s153 = scalar_lea.sflag [#allocation4], %s152
          %s154 = sand.u32 %s46, 1
          %s155 = smul.addr %s154, 32
          %s156 = scalar_lea.vmem [#allocation5], %s155
          %158 = dma.done %s153, 512
        $region40: #{tpu_custom_call.1} parent=35 // pred_fallthru
          _
      $region36: #{tpu_custom_call.1} parent=5 // pred_fallthru
        _
    $region6: #{tpu_custom_call.1} parent=1 // loop_footer
      %s15 = sadd.s32 1, %s11
    $region7: #{tpu_custom_call.1} parent=1 // loop_footer_branch
      %10 = sbr.rel target = $region3
    $region8: #{tpu_custom_call.1} parent=1 // loop_exit
      _
    %159 = vsyncpa [#allocation3], 1
    %s160 = scalar_lea.sflag [#allocation3], 1
    %161 = vsyncpa %s160, 1
    %162 = vsyncpa [#allocation4], 1
    %s163 = scalar_lea.sflag [#allocation4], 1
    %164 = vsyncpa %s163, 1

</llo_original>
